<compile_context>
chip_gen: v5e
topology: v5e:2x2
jax: 0.10.0
libtpu: 0.0.40
codegen_flags: <defaults>
</compile_context>

<pallas_src>
import functools

import jax
import jax.numpy as jnp
import numpy as np
from jax.experimental import pallas as pl
from jax.experimental.pallas import tpu as pltpu


def _huber_freq_kernel(yp_ref, yt_ref, win_ref, basis_ref, sel_ref, out_ref,
                       x_sc, st_sc, sp_sc, st2_sc, sp2_sc, sx_sc, hub_sc, cos_sc,
                       *, B, BC, L, Ft, n_flat, delta, inv_sr):
    k = pl.program_id(0)

    # ---- iteration 0: stage bf16 windowed signals + time-domain losses ----
    @pl.when(k == 0)
    def _init():
        yp = yp_ref[...]                              # (BC, L) f32
        yt = yt_ref[...]                              # (BC, L) f32
        win = win_ref[...]                            # (1, L) periodic Hann
        # Stacked bf16 LHS for the fused DFT matmul: rows [0:BC)=true, [BC:2BC)=pred.
        x_sc[...] = jnp.concatenate([yt * win, yp * win], axis=0).astype(jnp.bfloat16)

        st_sc[...] = jnp.zeros_like(st_sc)
        sp_sc[...] = jnp.zeros_like(sp_sc)
        st2_sc[...] = jnp.zeros_like(st2_sc)
        sp2_sc[...] = jnp.zeros_like(sp2_sc)
        sx_sc[...] = jnp.zeros_like(sx_sc)

        # Huber-style term (frequency weight applied later as a single scalar).
        diff = yt - yp
        adiff = jnp.abs(diff)
        huber = jnp.where(adiff <= delta, diff * diff,
                          delta * (adiff - 0.5 * delta))
        hub_sc[...] = jnp.sum(jnp.sum(huber, axis=1, keepdims=True),
                              axis=0, keepdims=True)                     # (1, 1)

        # Cosine-similarity term along the time axis.
        dot_pt = jnp.sum(yp * yt, axis=1, keepdims=True)                  # (BC, 1)
        nrm_p = jnp.sqrt(jnp.sum(yp * yp, axis=1, keepdims=True))
        nrm_t = jnp.sqrt(jnp.sum(yt * yt, axis=1, keepdims=True))
        cos = dot_pt / jnp.maximum(nrm_p * nrm_t, 1e-8)
        cos_sc[...] = jnp.sum(1.0 - cos, axis=0, keepdims=True)           # (1, 1)

    # ---- fused bf16 real-DFT for this (lane-dense) frequency tile ----
    coeffs = jnp.dot(x_sc[...], basis_ref[...],
                     preferred_element_type=jnp.float32)                  # (2BC, 2Ft)
    re = coeffs[:, :Ft]
    im = coeffs[:, Ft:]
    pwr = (re * re + im * im) * inv_sr                                    # (2BC, Ft)
    pt = pwr[:BC, :]                                                      # true
    pp = pwr[BC:, :]                                                      # pred

    # Raw-moment accumulators (padded bins have pwr == 0 and drop out).
    st_sc[...] += jnp.sum(pt, axis=1, keepdims=True)
    sp_sc[...] += jnp.sum(pp, axis=1, keepdims=True)
    st2_sc[...] += jnp.sum(pt * pt, axis=1, keepdims=True)
    sp2_sc[...] += jnp.sum(pp * pp, axis=1, keepdims=True)
    sx_sc[...] += jnp.sum(pt * pp, axis=1, keepdims=True)

    # ---- last iteration: per-batch correlation -> frequency weight -> loss ----
    @pl.when(k == pl.num_programs(0) - 1)
    def _finalize():
        sel = sel_ref[...]                     # (B, BC), rows pre-scaled by 1/n_flat
        m_t = jnp.dot(sel, st_sc[...], preferred_element_type=jnp.float32)   # E[pt]
        m_p = jnp.dot(sel, sp_sc[...], preferred_element_type=jnp.float32)   # E[pp]
        e_t2 = jnp.dot(sel, st2_sc[...], preferred_element_type=jnp.float32)  # E[pt^2]
        e_p2 = jnp.dot(sel, sp2_sc[...], preferred_element_type=jnp.float32)  # E[pp^2]
        e_tp = jnp.dot(sel, sx_sc[...], preferred_element_type=jnp.float32)   # E[pt*pp]

        bessel = n_flat / (n_flat - 1.0)       # torch.std default: unbiased
        var_t = jnp.maximum(e_t2 - m_t * m_t, 0.0) * bessel
        var_p = jnp.maximum(e_p2 - m_p * m_p, 0.0) * bessel
        cov = e_tp - m_t * m_p
        corr = cov / (jnp.sqrt(var_t) * jnp.sqrt(var_p) + 1e-8)               # (B, 1)
        similarity = jnp.sum(corr, axis=0, keepdims=True) * (1.0 / B)         # (1, 1)
        freq_w = jnp.exp(1.0 - jnp.abs(similarity))

        out_ref[...] = (freq_w * hub_sc[...] * (1.0 / (BC * L))
                        + cos_sc[...] * (1.0 / BC))


@functools.lru_cache(maxsize=8)
def _constants(B, C, L):
    """Host-side (numpy) constants, cached by shape: window, bf16 [cos|sin]
    basis laid out per frequency tile, and the 1/n_flat-scaled batch selector."""
    F = L // 2 + 1
    Fpad = ((F + 127) // 128) * 128           # lane-dense frequency axis
    # Frequency tile: multiple of 128, divides Fpad, bounded basis-tile VMEM.
    Ft = 128
    for cand in (512, 256):
        if Fpad % cand == 0 and L * 2 * cand * 2 <= (4 << 20):
            Ft = cand
            break
    nF = Fpad // Ft

    n = np.arange(L, dtype=np.float64)
    window = (0.5 - 0.5 * np.cos(2.0 * np.pi * n / L)).astype(np.float32)
    window = window.reshape(1, L)             # periodic Hann (torch.hann_window)

    kk = np.arange(Fpad, dtype=np.float64)
    phase = 2.0 * np.pi * np.outer(n, kk) / L                 # (L, Fpad)
    cosb = np.cos(phase)
    sinb = np.sin(phase)
    cosb[:, F:] = 0.0                                         # padded bins -> 0 power
    sinb[:, F:] = 0.0
    # Per-tile layout: [cos_tile | sin_tile] so one BlockSpec block is one tile.
    basis = np.stack([cosb.reshape(L, nF, Ft),
                      sinb.reshape(L, nF, Ft)], axis=2)       # (L, nF, 2, Ft)
    basis = basis.reshape(L, nF * 2 * Ft).astype(np.float32)

    BC = B * C
    n_flat = float(C * F)
    sel = (np.arange(BC)[None, :] // C == np.arange(B)[:, None]).astype(np.float32)
    sel = sel / np.float32(n_flat)                            # fold 1/n_flat

    return (jnp.asarray(window),
            jnp.asarray(basis, dtype=jnp.bfloat16),
            jnp.asarray(sel),
            F, Fpad, Ft, nF, n_flat)


def huber_freq_loss(y_pred, y_true, delta=0.05, sample_rate=360):
    """Pallas TPU implementation of HuberFreqLoss.forward. Inputs: (B, C, L)."""
    B, C, L = y_true.shape
    BC = B * C
    window, basis, sel, F, Fpad, Ft, nF, n_flat = _constants(B, C, L)

    yp2 = y_pred.astype(jnp.float32).reshape(BC, L)
    yt2 = y_true.astype(jnp.float32).reshape(BC, L)

    kern = functools.partial(
        _huber_freq_kernel, B=B, BC=BC, L=L, Ft=Ft, n_flat=n_flat,
        delta=float(delta), inv_sr=1.0 / float(sample_rate))

    cost = pl.CostEstimate(
        flops=int(2 * (2 * BC) * L * (2 * Fpad) + 12 * BC * L + 6 * BC * Fpad),
        transcendentals=int(2 * BC + 2 * B + 1),
        bytes_accessed=int((2 * BC * L + L + B * BC + 1) * 4 + basis.size * 2))

    vmem_bytes = (2 * (2 * BC * L * 4)          # yp/yt blocks (double-buffer worst case)
                  + L * 4 + B * BC * 4 + 4      # window, sel, out
                  + 2 * (L * 2 * Ft * 2)        # double-buffered bf16 basis tile
                  + 2 * BC * L * 2              # staged bf16 LHS scratch
                  + 5 * BC * 4 + 2 * 4)         # accumulators
    vmem_limit = int(min(max(2 * vmem_bytes + (1 << 20), 8 << 20), 48 << 20))

    grid_spec = pltpu.PrefetchScalarGridSpec(
        num_scalar_prefetch=0,
        grid=(nF,),                                              # frequency tiles
        in_specs=[
            pl.BlockSpec((BC, L), lambda k: (0, 0)),             # y_pred rows (resident)
            pl.BlockSpec((BC, L), lambda k: (0, 0)),             # y_true rows (resident)
            pl.BlockSpec((1, L), lambda k: (0, 0)),              # Hann window
            pl.BlockSpec((L, 2 * Ft), lambda k: (0, k)),         # streamed [cos|sin] tile
            pl.BlockSpec((B, BC), lambda k: (0, 0)),             # batch selector
        ],
        out_specs=pl.BlockSpec((1, 1), lambda k: (0, 0)),
        scratch_shapes=[pltpu.VMEM((2 * BC, L), jnp.bfloat16)]   # staged [true; pred]
                       + [pltpu.VMEM((BC, 1), jnp.float32)] * 5  # raw-moment accums
                       + [pltpu.VMEM((1, 1), jnp.float32)] * 2)  # huber / cos sums

    out = pl.pallas_call(
        kern,
        out_shape=jax.ShapeDtypeStruct((1, 1), jnp.float32),
        grid_spec=grid_spec,
        compiler_params=pltpu.CompilerParams(
            dimension_semantics=("arbitrary",),
            vmem_limit_bytes=vmem_limit),
        cost_estimate=cost,
    )(yp2, yt2, window, basis, sel)
    return out[0, 0]


def _reference(y_pred, y_true, delta=0.05, sample_rate=360):
    """Pure-JAX reference mirroring the PyTorch module (uses jnp.fft.rfft)."""
    L = y_true.shape[-1]
    n = jnp.arange(L, dtype=jnp.float32)
    window = 0.5 - 0.5 * jnp.cos(2.0 * jnp.pi * n / L)
    ft = jnp.fft.rfft(y_true * window, axis=-1)
    fp = jnp.fft.rfft(y_pred * window, axis=-1)
    pt = jnp.abs(ft) ** 2 / sample_rate
    pp = jnp.abs(fp) ** 2 / sample_rate
    flat_t = pt.reshape(pt.shape[0], -1)
    flat_p = pp.reshape(pp.shape[0], -1)
    mt = flat_t.mean(axis=1, keepdims=True)
    mp = flat_p.mean(axis=1, keepdims=True)
    st = flat_t.std(axis=1, ddof=1, keepdims=True)
    sp = flat_p.std(axis=1, ddof=1, keepdims=True)
    corr = jnp.mean((flat_t - mt) * (flat_p - mp), axis=1) / (st[:, 0] * sp[:, 0] + 1e-8)
    fw = jnp.exp(1.0 - jnp.abs(jnp.mean(corr)))
    diff = y_true - y_pred
    wl = fw * jnp.where(jnp.abs(diff) <= delta, diff ** 2,
                        delta * (jnp.abs(diff) - 0.5 * delta))
    dot = jnp.sum(y_pred * y_true, axis=-1)
    cos = dot / jnp.maximum(jnp.linalg.norm(y_pred, axis=-1)
                            * jnp.linalg.norm(y_true, axis=-1), 1e-8)
    return wl.mean() + (1.0 - cos).mean()


if __name__ == "__main__":
    B, C, L = 2, 4, 128
    key = jax.random.PRNGKey(0)
    k1, k2 = jax.random.split(key)
    y_true = jax.random.normal(k1, (B, C, L), dtype=jnp.float32)
    y_pred = y_true + 0.08 * jax.random.normal(k2, (B, C, L), dtype=jnp.float32)

    out = huber_freq_loss(y_pred, y_true)
    out = jax.block_until_ready(out)

    ref = _reference(y_pred, y_true)
    np.testing.assert_allclose(np.asarray(out), np.asarray(ref), rtol=1e-3, atol=1e-3)
    print("KERNEL_OK")
</pallas_src>

<mosaic_0001>
module attributes {stable_mosaic.version = 11 : i64} {
  func.func @_huber_freq_kernel(%arg0: i32, %arg1: memref<8x128xf32, #tpu.memory_space<vmem>>, %arg2: memref<8x128xf32, #tpu.memory_space<vmem>>, %arg3: memref<1x128xf32, #tpu.memory_space<vmem>>, %arg4: memref<128x256xbf16, #tpu.memory_space<vmem>>, %arg5: memref<2x8xf32, #tpu.memory_space<vmem>>, %arg6: memref<1x1xf32, #tpu.memory_space<vmem>>, %arg7: memref<16x128xbf16, #tpu.memory_space<vmem>>, %arg8: memref<8x1xf32, #tpu.memory_space<vmem>>, %arg9: memref<8x1xf32, #tpu.memory_space<vmem>>, %arg10: memref<8x1xf32, #tpu.memory_space<vmem>>, %arg11: memref<8x1xf32, #tpu.memory_space<vmem>>, %arg12: memref<8x1xf32, #tpu.memory_space<vmem>>, %arg13: memref<1x1xf32, #tpu.memory_space<vmem>>, %arg14: memref<1x1xf32, #tpu.memory_space<vmem>>) attributes {dimension_semantics = [#tpu.dimension_semantics<arbitrary>], iteration_bounds = array<i64: 1>, scalar_prefetch = 0 : i64, scratch_operands = 8 : i64, tpu.core_type = #tpu.core_type<tc>, window_params = [{pipeline_mode = #tpu.pipeline_mode<synchronous>, transform_indices = @transform_0, window_bounds = array<i64: 8, 128>}, {pipeline_mode = #tpu.pipeline_mode<synchronous>, transform_indices = @transform_1, window_bounds = array<i64: 8, 128>}, {pipeline_mode = #tpu.pipeline_mode<synchronous>, transform_indices = @transform_2, window_bounds = array<i64: 1, 128>}, {transform_indices = @transform_3, window_bounds = array<i64: 128, 256>}, {pipeline_mode = #tpu.pipeline_mode<synchronous>, transform_indices = @transform_4, window_bounds = array<i64: 2, 8>}, {pipeline_mode = #tpu.pipeline_mode<synchronous>, transform_indices = @transform_5, window_bounds = array<i64: 1, 1>}]} {
    %c0_i32 = arith.constant 0 : i32
    %0 = arith.cmpi eq, %arg0, %c0_i32 : i32
    %1 = arith.extui %0 : i1 to i32
    %c0_i32_0 = arith.constant 0 : i32
    %2 = arith.cmpi ne, %1, %c0_i32_0 : i32
    scf.if %2 {
      %c0_32 = arith.constant 0 : index
      %c0_33 = arith.constant 0 : index
      %46 = vector.load %arg1[%c0_32, %c0_33] : memref<8x128xf32, #tpu.memory_space<vmem>>, vector<8x128xf32>
      %c0_34 = arith.constant 0 : index
      %c0_35 = arith.constant 0 : index
      %47 = vector.load %arg2[%c0_34, %c0_35] : memref<8x128xf32, #tpu.memory_space<vmem>>, vector<8x128xf32>
      %c0_36 = arith.constant 0 : index
      %c0_37 = arith.constant 0 : index
      %48 = vector.load %arg3[%c0_36, %c0_37] : memref<1x128xf32, #tpu.memory_space<vmem>>, vector<1x128xf32>
      %49 = vector.broadcast %48 : vector<1x128xf32> to vector<8x128xf32>
      %50 = arith.mulf %47, %49 : vector<8x128xf32>
      %51 = vector.broadcast %48 : vector<1x128xf32> to vector<8x128xf32>
      %52 = arith.mulf %46, %51 : vector<8x128xf32>
      %53 = tpu.concatenate %50, %52 in 0 : vector<8x128xf32>, vector<8x128xf32> -> vector<16x128xf32>
      %54 = arith.truncf %53 : vector<16x128xf32> to vector<16x128xbf16>
      %c0_38 = arith.constant 0 : index
      %c0_39 = arith.constant 0 : index
      %55 = vector.load %arg7[%c0_38, %c0_39] : memref<16x128xbf16, #tpu.memory_space<vmem>>, vector<16x128xbf16>
      tpu.vector_store %arg7[%c0_38, %c0_39], %54 {strides = array<i32>} : memref<16x128xbf16, #tpu.memory_space<vmem>>, vector<16x128xbf16>,
      %cst_40 = arith.constant 0.000000e+00 : f32
      %56 = vector.broadcast %cst_40 : f32 to vector<8x1xf32>
      %c0_41 = arith.constant 0 : index
      %c0_42 = arith.constant 0 : index
      %57 = vector.load %arg8[%c0_41, %c0_42] : memref<8x1xf32, #tpu.memory_space<vmem>>, vector<8x1xf32>
      tpu.vector_store %arg8[%c0_41, %c0_42], %56 {strides = array<i32>} : memref<8x1xf32, #tpu.memory_space<vmem>>, vector<8x1xf32>,
      %cst_43 = arith.constant 0.000000e+00 : f32
      %58 = vector.broadcast %cst_43 : f32 to vector<8x1xf32>
      %c0_44 = arith.constant 0 : index
      %c0_45 = arith.constant 0 : index
      %59 = vector.load %arg9[%c0_44, %c0_45] : memref<8x1xf32, #tpu.memory_space<vmem>>, vector<8x1xf32>
      tpu.vector_store %arg9[%c0_44, %c0_45], %58 {strides = array<i32>} : memref<8x1xf32, #tpu.memory_space<vmem>>, vector<8x1xf32>,
      %cst_46 = arith.constant 0.000000e+00 : f32
      %60 = vector.broadcast %cst_46 : f32 to vector<8x1xf32>
      %c0_47 = arith.constant 0 : index
      %c0_48 = arith.constant 0 : index
      %61 = vector.load %arg10[%c0_47, %c0_48] : memref<8x1xf32, #tpu.memory_space<vmem>>, vector<8x1xf32>
      tpu.vector_store %arg10[%c0_47, %c0_48], %60 {strides = array<i32>} : memref<8x1xf32, #tpu.memory_space<vmem>>, vector<8x1xf32>,
      %cst_49 = arith.constant 0.000000e+00 : f32
      %62 = vector.broadcast %cst_49 : f32 to vector<8x1xf32>
      %c0_50 = arith.constant 0 : index
      %c0_51 = arith.constant 0 : index
      %63 = vector.load %arg11[%c0_50, %c0_51] : memref<8x1xf32, #tpu.memory_space<vmem>>, vector<8x1xf32>
      tpu.vector_store %arg11[%c0_50, %c0_51], %62 {strides = array<i32>} : memref<8x1xf32, #tpu.memory_space<vmem>>, vector<8x1xf32>,
      %cst_52 = arith.constant 0.000000e+00 : f32
      %64 = vector.broadcast %cst_52 : f32 to vector<8x1xf32>
      %c0_53 = arith.constant 0 : index
      %c0_54 = arith.constant 0 : index
      %65 = vector.load %arg12[%c0_53, %c0_54] : memref<8x1xf32, #tpu.memory_space<vmem>>, vector<8x1xf32>
      tpu.vector_store %arg12[%c0_53, %c0_54], %64 {strides = array<i32>} : memref<8x1xf32, #tpu.memory_space<vmem>>, vector<8x1xf32>,
      %66 = arith.subf %47, %46 : vector<8x128xf32>
      %67 = math.absf %66 : vector<8x128xf32>
      %cst_55 = arith.constant 5.000000e-02 : f32
      %68 = vector.broadcast %cst_55 : f32 to vector<8x128xf32>
      %69 = arith.cmpf ole, %67, %68 : vector<8x128xf32>
      %70 = arith.mulf %66, %66 : vector<8x128xf32>
      %cst_56 = arith.constant 2.500000e-02 : f32
      %71 = vector.broadcast %cst_56 : f32 to vector<8x128xf32>
      %72 = arith.subf %67, %71 : vector<8x128xf32>
      %cst_57 = arith.constant 5.000000e-02 : f32
      %73 = vector.broadcast %cst_57 : f32 to vector<8x128xf32>
      %74 = arith.mulf %73, %72 : vector<8x128xf32>
      %75 = arith.select %69, %70, %74 : vector<8x128xi1>, vector<8x128xf32>
      %cst_58 = arith.constant dense<0.000000e+00> : vector<8xf32>
      %76 = vector.multi_reduction <add>, %75, %cst_58 [1] : vector<8x128xf32> to vector<8xf32>
      %77 = vector.shape_cast %76 : vector<8xf32> to vector<8x1xf32>
      %cst_59 = arith.constant dense<0.000000e+00> : vector<1xf32>
      %78 = vector.multi_reduction <add>, %77, %cst_59 [0] : vector<8x1xf32> to vector<1xf32>
      %79 = vector.shape_cast %78 : vector<1xf32> to vector<1x1xf32>
      %c0_60 = arith.constant 0 : index
      %c0_61 = arith.constant 0 : index
      %80 = vector.load %arg13[%c0_60, %c0_61] : memref<1x1xf32, #tpu.memory_space<vmem>>, vector<1x1xf32>
      tpu.vector_store %arg13[%c0_60, %c0_61], %79 {strides = array<i32>} : memref<1x1xf32, #tpu.memory_space<vmem>>, vector<1x1xf32>,
      %81 = arith.mulf %46, %47 : vector<8x128xf32>
      %cst_62 = arith.constant dense<0.000000e+00> : vector<8xf32>
      %82 = vector.multi_reduction <add>, %81, %cst_62 [1] : vector<8x128xf32> to vector<8xf32>
      %83 = vector.shape_cast %82 : vector<8xf32> to vector<8x1xf32>
      %84 = arith.mulf %46, %46 : vector<8x128xf32>
      %cst_63 = arith.constant dense<0.000000e+00> : vector<8xf32>
      %85 = vector.multi_reduction <add>, %84, %cst_63 [1] : vector<8x128xf32> to vector<8xf32>
      %86 = vector.shape_cast %85 : vector<8xf32> to vector<8x1xf32>
      %87 = math.sqrt %86 : vector<8x1xf32>
      %88 = arith.mulf %47, %47 : vector<8x128xf32>
      %cst_64 = arith.constant dense<0.000000e+00> : vector<8xf32>
      %89 = vector.multi_reduction <add>, %88, %cst_64 [1] : vector<8x128xf32> to vector<8xf32>
      %90 = vector.shape_cast %89 : vector<8xf32> to vector<8x1xf32>
      %91 = math.sqrt %90 : vector<8x1xf32>
      %92 = arith.mulf %87, %91 : vector<8x1xf32>
      %cst_65 = arith.constant 9.99999993E-9 : f32
      %93 = vector.broadcast %cst_65 : f32 to vector<8x1xf32>
      %94 = arith.maximumf %92, %93 : vector<8x1xf32>
      %95 = arith.divf %83, %94 : vector<8x1xf32>
      %cst_66 = arith.constant 1.000000e+00 : f32
      %96 = vector.broadcast %cst_66 : f32 to vector<8x1xf32>
      %97 = arith.subf %96, %95 : vector<8x1xf32>
      %cst_67 = arith.constant dense<0.000000e+00> : vector<1xf32>
      %98 = vector.multi_reduction <add>, %97, %cst_67 [0] : vector<8x1xf32> to vector<1xf32>
      %99 = vector.shape_cast %98 : vector<1xf32> to vector<1x1xf32>
      %c0_68 = arith.constant 0 : index
      %c0_69 = arith.constant 0 : index
      %100 = vector.load %arg14[%c0_68, %c0_69] : memref<1x1xf32, #tpu.memory_space<vmem>>, vector<1x1xf32>
      tpu.vector_store %arg14[%c0_68, %c0_69], %99 {strides = array<i32>} : memref<1x1xf32, #tpu.memory_space<vmem>>, vector<1x1xf32>,
    } else {
    }
    %c0 = arith.constant 0 : index
    %c0_1 = arith.constant 0 : index
    %3 = vector.load %arg7[%c0, %c0_1] : memref<16x128xbf16, #tpu.memory_space<vmem>>, vector<16x128xbf16>
    %c0_2 = arith.constant 0 : index
    %c0_3 = arith.constant 0 : index
    %4 = vector.load %arg4[%c0_2, %c0_3] : memref<128x256xbf16, #tpu.memory_space<vmem>>, vector<128x256xbf16>
    %cst = arith.constant dense<0.000000e+00> : vector<16x256xf32>
    %5 = tpu.matmul %3, %4, %cst {dimension_numbers = #tpu.dot_dimension_numbers<[1], [0], [0], [1], [0, 0, 1, 1], [], []>} : vector<16x128xbf16>, vector<128x256xbf16>, vector<16x256xf32> -> vector<16x256xf32>
    %6 = vector.extract_strided_slice %5 {offsets = [0, 0], sizes = [16, 128], strides = [1, 1]} : vector<16x256xf32> to vector<16x128xf32>
    %7 = vector.extract_strided_slice %5 {offsets = [0, 128], sizes = [16, 128], strides = [1, 1]} : vector<16x256xf32> to vector<16x128xf32>
    %8 = arith.mulf %6, %6 : vector<16x128xf32>
    %9 = arith.mulf %7, %7 : vector<16x128xf32>
    %10 = arith.addf %8, %9 : vector<16x128xf32>
    %cst_4 = arith.constant 0.00277777785 : f32
    %11 = vector.broadcast %cst_4 : f32 to vector<16x128xf32>
    %12 = arith.mulf %10, %11 : vector<16x128xf32>
    %13 = vector.extract_strided_slice %12 {offsets = [0, 0], sizes = [8, 128], strides = [1, 1]} : vector<16x128xf32> to vector<8x128xf32>
    %14 = vector.extract_strided_slice %12 {offsets = [8, 0], sizes = [8, 128], strides = [1, 1]} : vector<16x128xf32> to vector<8x128xf32>
    %c0_5 = arith.constant 0 : index
    %c0_6 = arith.constant 0 : index
    %15 = vector.load %arg8[%c0_5, %c0_6] : memref<8x1xf32, #tpu.memory_space<vmem>>, vector<8x1xf32>
    %cst_7 = arith.constant dense<0.000000e+00> : vector<8xf32>
    %16 = vector.multi_reduction <add>, %13, %cst_7 [1] : vector<8x128xf32> to vector<8xf32>
    %17 = vector.shape_cast %16 : vector<8xf32> to vector<8x1xf32>
    %18 = arith.addf %15, %17 : vector<8x1xf32>
    %c0_8 = arith.constant 0 : index
    %c0_9 = arith.constant 0 : index
    %19 = vector.load %arg8[%c0_8, %c0_9] : memref<8x1xf32, #tpu.memory_space<vmem>>, vector<8x1xf32>
    tpu.vector_store %arg8[%c0_8, %c0_9], %18 {strides = array<i32>} : memref<8x1xf32, #tpu.memory_space<vmem>>, vector<8x1xf32>,
    %c0_10 = arith.constant 0 : index
    %c0_11 = arith.constant 0 : index
    %20 = vector.load %arg9[%c0_10, %c0_11] : memref<8x1xf32, #tpu.memory_space<vmem>>, vector<8x1xf32>
    %cst_12 = arith.constant dense<0.000000e+00> : vector<8xf32>
    %21 = vector.multi_reduction <add>, %14, %cst_12 [1] : vector<8x128xf32> to vector<8xf32>
    %22 = vector.shape_cast %21 : vector<8xf32> to vector<8x1xf32>
    %23 = arith.addf %20, %22 : vector<8x1xf32>
    %c0_13 = arith.constant 0 : index
    %c0_14 = arith.constant 0 : index
    %24 = vector.load %arg9[%c0_13, %c0_14] : memref<8x1xf32, #tpu.memory_space<vmem>>, vector<8x1xf32>
    tpu.vector_store %arg9[%c0_13, %c0_14], %23 {strides = array<i32>} : memref<8x1xf32, #tpu.memory_space<vmem>>, vector<8x1xf32>,
    %c0_15 = arith.constant 0 : index
    %c0_16 = arith.constant 0 : index
    %25 = vector.load %arg10[%c0_15, %c0_16] : memref<8x1xf32, #tpu.memory_space<vmem>>, vector<8x1xf32>
    %26 = arith.mulf %13, %13 : vector<8x128xf32>
    %cst_17 = arith.constant dense<0.000000e+00> : vector<8xf32>
    %27 = vector.multi_reduction <add>, %26, %cst_17 [1] : vector<8x128xf32> to vector<8xf32>
    %28 = vector.shape_cast %27 : vector<8xf32> to vector<8x1xf32>
    %29 = arith.addf %25, %28 : vector<8x1xf32>
    %c0_18 = arith.constant 0 : index
    %c0_19 = arith.constant 0 : index
    %30 = vector.load %arg10[%c0_18, %c0_19] : memref<8x1xf32, #tpu.memory_space<vmem>>, vector<8x1xf32>
    tpu.vector_store %arg10[%c0_18, %c0_19], %29 {strides = array<i32>} : memref<8x1xf32, #tpu.memory_space<vmem>>, vector<8x1xf32>,
    %c0_20 = arith.constant 0 : index
    %c0_21 = arith.constant 0 : index
    %31 = vector.load %arg11[%c0_20, %c0_21] : memref<8x1xf32, #tpu.memory_space<vmem>>, vector<8x1xf32>
    %32 = arith.mulf %14, %14 : vector<8x128xf32>
    %cst_22 = arith.constant dense<0.000000e+00> : vector<8xf32>
    %33 = vector.multi_reduction <add>, %32, %cst_22 [1] : vector<8x128xf32> to vector<8xf32>
    %34 = vector.shape_cast %33 : vector<8xf32> to vector<8x1xf32>
    %35 = arith.addf %31, %34 : vector<8x1xf32>
    %c0_23 = arith.constant 0 : index
    %c0_24 = arith.constant 0 : index
    %36 = vector.load %arg11[%c0_23, %c0_24] : memref<8x1xf32, #tpu.memory_space<vmem>>, vector<8x1xf32>
    tpu.vector_store %arg11[%c0_23, %c0_24], %35 {strides = array<i32>} : memref<8x1xf32, #tpu.memory_space<vmem>>, vector<8x1xf32>,
    %c0_25 = arith.constant 0 : index
    %c0_26 = arith.constant 0 : index
    %37 = vector.load %arg12[%c0_25, %c0_26] : memref<8x1xf32, #tpu.memory_space<vmem>>, vector<8x1xf32>
    %38 = arith.mulf %13, %14 : vector<8x128xf32>
    %cst_27 = arith.constant dense<0.000000e+00> : vector<8xf32>
    %39 = vector.multi_reduction <add>, %38, %cst_27 [1] : vector<8x128xf32> to vector<8xf32>
    %40 = vector.shape_cast %39 : vector<8xf32> to vector<8x1xf32>
    %41 = arith.addf %37, %40 : vector<8x1xf32>
    %c0_28 = arith.constant 0 : index
    %c0_29 = arith.constant 0 : index
    %42 = vector.load %arg12[%c0_28, %c0_29] : memref<8x1xf32, #tpu.memory_space<vmem>>, vector<8x1xf32>
    tpu.vector_store %arg12[%c0_28, %c0_29], %41 {strides = array<i32>} : memref<8x1xf32, #tpu.memory_space<vmem>>, vector<8x1xf32>,
    %c0_i32_30 = arith.constant 0 : i32
    %43 = arith.cmpi eq, %arg0, %c0_i32_30 : i32
    %44 = arith.extui %43 : i1 to i32
    %c0_i32_31 = arith.constant 0 : i32
    %45 = arith.cmpi ne, %44, %c0_i32_31 : i32
    scf.if %45 {
      %c0_32 = arith.constant 0 : index
      %c0_33 = arith.constant 0 : index
      %46 = vector.load %arg5[%c0_32, %c0_33] : memref<2x8xf32, #tpu.memory_space<vmem>>, vector<2x8xf32>
      %c0_34 = arith.constant 0 : index
      %c0_35 = arith.constant 0 : index
      %47 = vector.load %arg8[%c0_34, %c0_35] : memref<8x1xf32, #tpu.memory_space<vmem>>, vector<8x1xf32>
      %cst_36 = arith.constant dense<0.000000e+00> : vector<2x1xf32>
      %48 = tpu.matmul %46, %47, %cst_36 {dimension_numbers = #tpu.dot_dimension_numbers<[1], [0], [0], [1], [0, 0, 1, 1], [], []>} : vector<2x8xf32>, vector<8x1xf32>, vector<2x1xf32> -> vector<2x1xf32>
      %c0_37 = arith.constant 0 : index
      %c0_38 = arith.constant 0 : index
      %49 = vector.load %arg9[%c0_37, %c0_38] : memref<8x1xf32, #tpu.memory_space<vmem>>, vector<8x1xf32>
      %cst_39 = arith.constant dense<0.000000e+00> : vector<2x1xf32>
      %50 = tpu.matmul %46, %49, %cst_39 {dimension_numbers = #tpu.dot_dimension_numbers<[1], [0], [0], [1], [0, 0, 1, 1], [], []>} : vector<2x8xf32>, vector<8x1xf32>, vector<2x1xf32> -> vector<2x1xf32>
      %c0_40 = arith.constant 0 : index
      %c0_41 = arith.constant 0 : index
      %51 = vector.load %arg10[%c0_40, %c0_41] : memref<8x1xf32, #tpu.memory_space<vmem>>, vector<8x1xf32>
      %cst_42 = arith.constant dense<0.000000e+00> : vector<2x1xf32>
      %52 = tpu.matmul %46, %51, %cst_42 {dimension_numbers = #tpu.dot_dimension_numbers<[1], [0], [0], [1], [0, 0, 1, 1], [], []>} : vector<2x8xf32>, vector<8x1xf32>, vector<2x1xf32> -> vector<2x1xf32>
      %c0_43 = arith.constant 0 : index
      %c0_44 = arith.constant 0 : index
      %53 = vector.load %arg11[%c0_43, %c0_44] : memref<8x1xf32, #tpu.memory_space<vmem>>, vector<8x1xf32>
      %cst_45 = arith.constant dense<0.000000e+00> : vector<2x1xf32>
      %54 = tpu.matmul %46, %53, %cst_45 {dimension_numbers = #tpu.dot_dimension_numbers<[1], [0], [0], [1], [0, 0, 1, 1], [], []>} : vector<2x8xf32>, vector<8x1xf32>, vector<2x1xf32> -> vector<2x1xf32>
      %c0_46 = arith.constant 0 : index
      %c0_47 = arith.constant 0 : index
      %55 = vector.load %arg12[%c0_46, %c0_47] : memref<8x1xf32, #tpu.memory_space<vmem>>, vector<8x1xf32>
      %cst_48 = arith.constant dense<0.000000e+00> : vector<2x1xf32>
      %56 = tpu.matmul %46, %55, %cst_48 {dimension_numbers = #tpu.dot_dimension_numbers<[1], [0], [0], [1], [0, 0, 1, 1], [], []>} : vector<2x8xf32>, vector<8x1xf32>, vector<2x1xf32> -> vector<2x1xf32>
      %57 = arith.mulf %48, %48 : vector<2x1xf32>
      %58 = arith.subf %52, %57 : vector<2x1xf32>
      %cst_49 = arith.constant 0.000000e+00 : f32
      %59 = vector.broadcast %cst_49 : f32 to vector<2x1xf32>
      %60 = arith.maximumf %58, %59 : vector<2x1xf32>
      %cst_50 = arith.constant 1.00386095 : f32
      %61 = vector.broadcast %cst_50 : f32 to vector<2x1xf32>
      %62 = arith.mulf %60, %61 : vector<2x1xf32>
      %63 = arith.mulf %50, %50 : vector<2x1xf32>
      %64 = arith.subf %54, %63 : vector<2x1xf32>
      %cst_51 = arith.constant 0.000000e+00 : f32
      %65 = vector.broadcast %cst_51 : f32 to vector<2x1xf32>
      %66 = arith.maximumf %64, %65 : vector<2x1xf32>
      %cst_52 = arith.constant 1.00386095 : f32
      %67 = vector.broadcast %cst_52 : f32 to vector<2x1xf32>
      %68 = arith.mulf %66, %67 : vector<2x1xf32>
      %69 = arith.mulf %48, %50 : vector<2x1xf32>
      %70 = arith.subf %56, %69 : vector<2x1xf32>
      %71 = math.sqrt %62 : vector<2x1xf32>
      %72 = math.sqrt %68 : vector<2x1xf32>
      %73 = arith.mulf %71, %72 : vector<2x1xf32>
      %cst_53 = arith.constant 9.99999993E-9 : f32
      %74 = vector.broadcast %cst_53 : f32 to vector<2x1xf32>
      %75 = arith.addf %73, %74 : vector<2x1xf32>
      %76 = arith.divf %70, %75 : vector<2x1xf32>
      %cst_54 = arith.constant dense<0.000000e+00> : vector<1xf32>
      %77 = vector.multi_reduction <add>, %76, %cst_54 [0] : vector<2x1xf32> to vector<1xf32>
      %78 = vector.shape_cast %77 : vector<1xf32> to vector<1x1xf32>
      %cst_55 = arith.constant 5.000000e-01 : f32
      %79 = vector.broadcast %cst_55 : f32 to vector<1x1xf32>
      %80 = arith.mulf %78, %79 : vector<1x1xf32>
      %81 = math.absf %80 : vector<1x1xf32>
      %cst_56 = arith.constant 1.000000e+00 : f32
      %82 = vector.broadcast %cst_56 : f32 to vector<1x1xf32>
      %83 = arith.subf %82, %81 : vector<1x1xf32>
      %84 = math.exp %83 : vector<1x1xf32>
      %c0_57 = arith.constant 0 : index
      %c0_58 = arith.constant 0 : index
      %85 = vector.load %arg13[%c0_57, %c0_58] : memref<1x1xf32, #tpu.memory_space<vmem>>, vector<1x1xf32>
      %86 = arith.mulf %84, %85 : vector<1x1xf32>
      %cst_59 = arith.constant 9.765625E-4 : f32
      %87 = vector.broadcast %cst_59 : f32 to vector<1x1xf32>
      %88 = arith.mulf %86, %87 : vector<1x1xf32>
      %c0_60 = arith.constant 0 : index
      %c0_61 = arith.constant 0 : index
      %89 = vector.load %arg14[%c0_60, %c0_61] : memref<1x1xf32, #tpu.memory_space<vmem>>, vector<1x1xf32>
      %cst_62 = arith.constant 1.250000e-01 : f32
      %90 = vector.broadcast %cst_62 : f32 to vector<1x1xf32>
      %91 = arith.mulf %89, %90 : vector<1x1xf32>
      %92 = arith.addf %88, %91 : vector<1x1xf32>
      %c0_63 = arith.constant 0 : index
      %c0_64 = arith.constant 0 : index
      %93 = vector.load %arg6[%c0_63, %c0_64] : memref<1x1xf32, #tpu.memory_space<vmem>>, vector<1x1xf32>
      tpu.vector_store %arg6[%c0_63, %c0_64], %92 {strides = array<i32>} : memref<1x1xf32, #tpu.memory_space<vmem>>, vector<1x1xf32>,
    } else {
    }
    return
  }
  func.func @transform_0(%arg0: i32) -> (i32, i32) {
    %c0_i32 = arith.constant 0 : i32
    %c0_i32_0 = arith.constant 0 : i32
    %c0_i32_1 = arith.constant 0 : i32
    return %c0_i32, %c0_i32_0 : i32, i32
  }
  func.func @transform_1(%arg0: i32) -> (i32, i32) {
    %c0_i32 = arith.constant 0 : i32
    %c0_i32_0 = arith.constant 0 : i32
    %c0_i32_1 = arith.constant 0 : i32
    return %c0_i32, %c0_i32_0 : i32, i32
  }
  func.func @transform_2(%arg0: i32) -> (i32, i32) {
    %c0_i32 = arith.constant 0 : i32
    %c0_i32_0 = arith.constant 0 : i32
    %c0_i32_1 = arith.constant 0 : i32
    return %c0_i32, %c0_i32_0 : i32, i32
  }
  func.func @transform_3(%arg0: i32) -> (i32, i32) {
    %c0_i32 = arith.constant 0 : i32
    %c0_i32_0 = arith.constant 0 : i32
    return %c0_i32, %arg0 : i32, i32
  }
  func.func @transform_4(%arg0: i32) -> (i32, i32) {
    %c0_i32 = arith.constant 0 : i32
    %c0_i32_0 = arith.constant 0 : i32
    %c0_i32_1 = arith.constant 0 : i32
    return %c0_i32, %c0_i32_0 : i32, i32
  }
  func.func @transform_5(%arg0: i32) -> (i32, i32) {
    %c0_i32 = arith.constant 0 : i32
    %c0_i32_0 = arith.constant 0 : i32
    %c0_i32_1 = arith.constant 0 : i32
    return %c0_i32, %c0_i32_0 : i32, i32
  }
}

</mosaic_0001>

<llo_original>
// kernel: tpu_custom_call.1
$region0: #{tpu_custom_call.1}
  #allocation0 [shape = 'u32[]', space=smem, size = 0x4, offset = 0x4, fixed_abs, tag = 'smem constant byte address 0x4 - core index']
  #allocation1 [shape = 'u32[72,128]{1,0:T(1,128)}', space=vmem, size = 0x9000, scoped, tag = 'internal scratch']
  #allocation2 [shape = 'bf16[16,128]{1,0:T(8,128)(2,1)}', space=vmem, size = 0x1000, scoped, tag = 'scratch operand']
  #allocation3 [shape = 'f32[8,1]{1,0:T(8,128)}', space=vmem, size = 0x1000, scoped, tag = 'scratch operand']
  #allocation4 [shape = 'f32[8,1]{1,0:T(8,128)}', space=vmem, size = 0x1000, scoped, tag = 'scratch operand']
  #allocation5 [shape = 'f32[8,1]{1,0:T(8,128)}', space=vmem, size = 0x1000, scoped, tag = 'scratch operand']
  #allocation6 [shape = 'f32[8,1]{1,0:T(8,128)}', space=vmem, size = 0x1000, scoped, tag = 'scratch operand']
  #allocation7 [shape = 'f32[8,1]{1,0:T(8,128)}', space=vmem, size = 0x1000, scoped, tag = 'scratch operand']
  #allocation8 [shape = 'f32[1,1]{1,0:T(1,128)}', space=vmem, size = 0x200, scoped, tag = 'scratch operand']
  #allocation9 [shape = 'f32[1,1]{1,0:T(1,128)}', space=vmem, size = 0x200, scoped, tag = 'scratch operand']
  %s0 = inlined_call_operand.hbm [shape: f32[8,128], index: 0, kind: input, shape index: {}]
  %s1 = inlined_call_operand.hbm [shape: f32[8,128], index: 1, kind: input, shape index: {}]
  %s2 = inlined_call_operand.vmem [shape: f32[1,128], index: 2, kind: input, shape index: {}]
  %s3 = inlined_call_operand.hbm [shape: bf16[128,256], index: 3, kind: input, shape index: {}]
  %s4 = inlined_call_operand.vmem [shape: f32[2,8], index: 4, kind: input, shape index: {}]
  %s5 = inlined_call_operand.hbm [shape: f32[1,1], index: 5, kind: output, shape index: {}]
  %s6 = sld [smem:[#allocation0]]
  $region50: #{tpu_custom_call.1} parent=0
    _
  %s8 = ssub.s32 1, %s6
  %s9 = scalar_select 0, %s8, %s6
  $region1: #{tpu_custom_call.1} parent=0
    #allocation10 [shape = 'u8[4096]{0}', space=vmem, size = 0x1000, scoped, tag = 'input window, operand 0, single buffered']
    #allocation11 [shape = 's32[1]{0}', space=sflag, size = 0x4, scoped, tag = 'scoped memory for tpu_custom_call.1']
    #allocation12 [shape = 's32[1]{0}', space=sflag, size = 0x4, scoped, tag = 'scoped memory for tpu_custom_call.1']
    #allocation13 [shape = 'u8[4096]{0}', space=vmem, size = 0x1000, scoped, tag = 'input window, operand 1, single buffered']
    #allocation14 [shape = 's32[1]{0}', space=sflag, size = 0x4, scoped, tag = 'scoped memory for tpu_custom_call.1']
    #allocation15 [shape = 'u8[65536]{0}', space=vmem, size = 0x10000, scoped, tag = 'input window, operand 3, single buffered']
    #allocation16 [shape = 'u8[512]{0}', space=vmem, size = 0x400, scoped, tag = 'output window, operand 0, single buffered']
    %10 = vsyncpa [#allocation11], 0
    %11 = vsyncpa [#allocation14], 0
    %12 = vsyncpa [#allocation12], 0
    // Predicated region
    $region2: #{tpu_custom_call.1} parent=1 // pred_check
      _
    $region3: #{tpu_custom_call.1} parent=1 // pred_check_branch
      %14 = sbr.rel (0) target = $region5
    $region4: #{tpu_custom_call.1} parent=1 // pred_region
      %16 = vsyncadd [#allocation11], 0
      %s18 = sshll.u32 %s0, 4
      %s19 = int_to_ptr.hbm [resolvable:$true] %s18
      %s20 = sshll.u32 [#allocation10], 4
      %s21 = int_to_ptr.vmem [resolvable:$true] %s20
      %23 = dma.hbm_to_vmem [thread:$0]  %s19, 128, %s21, [#allocation11]
    $region5: #{tpu_custom_call.1} parent=1 // pred_fallthru
      _
    // Predicated region
    $region6: #{tpu_custom_call.1} parent=1 // pred_check
      _
    $region7: #{tpu_custom_call.1} parent=1 // pred_check_branch
      %25 = sbr.rel (0) target = $region9
    $region8: #{tpu_custom_call.1} parent=1 // pred_region
      %27 = vsyncadd [#allocation14], 0
      %s29 = sshll.u32 %s1, 4
      %s30 = int_to_ptr.hbm [resolvable:$true] %s29
      %s31 = sshll.u32 [#allocation13], 4
      %s32 = int_to_ptr.vmem [resolvable:$true] %s31
      %34 = dma.hbm_to_vmem [thread:$0]  %s30, 128, %s32, [#allocation14]
    $region9: #{tpu_custom_call.1} parent=1 // pred_fallthru
      _
    // Predicated region
    $region10: #{tpu_custom_call.1} parent=1 // pred_check
      _
    $region11: #{tpu_custom_call.1} parent=1 // pred_check_branch
      %36 = sbr.rel (0) target = $region13
    $region12: #{tpu_custom_call.1} parent=1 // pred_region
      _
    $region13: #{tpu_custom_call.1} parent=1 // pred_fallthru
      _
    // Predicated region
    $region14: #{tpu_custom_call.1} parent=1 // pred_check
      _
    $region15: #{tpu_custom_call.1} parent=1 // pred_check_branch
      %38 = sbr.rel (0) target = $region17
    $region16: #{tpu_custom_call.1} parent=1 // pred_region
      %40 = vsyncadd [#allocation14], 0
      %s41 = sshll.u32 %s3, 4
      %s42 = int_to_ptr.hbm [resolvable:$true] %s41
      %s43 = sshll.u32 [#allocation15], 4
      %s44 = int_to_ptr.vmem [resolvable:$true] %s43
      %49 = dma.hbm_to_vmem [thread:$0]  %s42, 2048, %s44, [#allocation14], 128, 128, 8
    $region17: #{tpu_custom_call.1} parent=1 // pred_fallthru
      _
    // Predicated region
    $region18: #{tpu_custom_call.1} parent=1 // pred_check
      _
    $region19: #{tpu_custom_call.1} parent=1 // pred_check_branch
      %51 = sbr.rel (0) target = $region21
    $region20: #{tpu_custom_call.1} parent=1 // pred_region
      _
    $region21: #{tpu_custom_call.1} parent=1 // pred_fallthru
      _
    // Predicated region
    $region22: #{tpu_custom_call.1} parent=1 // pred_check
      _
    $region23: #{tpu_custom_call.1} parent=1 // pred_check_branch
      %53 = sbr.rel (0) target = $region25
    $region24: #{tpu_custom_call.1} parent=1 // pred_region
      %55 = dma.done [#allocation11], 128
    $region25: #{tpu_custom_call.1} parent=1 // pred_fallthru
      _
    // Predicated region
    $region26: #{tpu_custom_call.1} parent=1 // pred_check
      _
    $region27: #{tpu_custom_call.1} parent=1 // pred_check_branch
      %57 = sbr.rel (0) target = $region29
    $region28: #{tpu_custom_call.1} parent=1 // pred_region
      %59 = dma.done [#allocation14], 128
    $region29: #{tpu_custom_call.1} parent=1 // pred_fallthru
      _
    // Predicated region
    $region30: #{tpu_custom_call.1} parent=1 // pred_check
      _
    $region31: #{tpu_custom_call.1} parent=1 // pred_check_branch
      %61 = sbr.rel (0) target = $region33
    $region32: #{tpu_custom_call.1} parent=1 // pred_region
      %63 = dma.done [#allocation14], 2048
    $region33: #{tpu_custom_call.1} parent=1 // pred_fallthru
      _
    %p64 = scmp.eq.s32.totalorder 0, 0
    // Predicated region
    $region34: #{tpu_custom_call.1} parent=1 // pred_check
      %p65 = pneg %p64
    $region35: #{tpu_custom_call.1} parent=1 // pred_check_branch
      %67 = sbr.rel (%p65) target = $region37
    $region36: #{tpu_custom_call.1} parent=1 // pred_region
      %v68 = vld [vmem:[#allocation10] sm:$0xff]
      %v69 = vld [vmem:[#allocation13] sm:$0xff]
      %v70 = vld [vmem:[%s2] sm:$0x1]
      %v72 = vperm.slane %v70, 0
      %v74 = vmul.f32 %v69, %v72
      %v75 = vmul.f32 %v68, %v72
      %v76 = vpack.c.bf16 %v74, %v74
      %v77 = vpack.c.bf16 %v75, %v75
      %78 = vst [vmem:[#allocation2] sm:$0xf] %v76
      %79 = vst [vmem:[#allocation2 + $0x4] sm:$0xf] %v77
      %vm80 = vcmask 7168
      %81 = vst.msk [vmem:[#allocation3] sm:$0xff] %vm80, 0.0
      %82 = vst.msk [vmem:[#allocation4] sm:$0xff] %vm80, 0.0
      %83 = vst.msk [vmem:[#allocation5] sm:$0xff] %vm80, 0.0
      %84 = vst.msk [vmem:[#allocation6] sm:$0xff] %vm80, 0.0
      %85 = vst.msk [vmem:[#allocation7] sm:$0xff] %vm80, 0.0
      %v86 = vsub.f32 %v69, %v68
      %v87 = vand.u32 2147483647, %v86
      %vm88 = vcmp.le.f32.partialorder %v87, 0.05
      %v89 = vmul.f32 %v86, %v86
      %v90 = vsub.f32 %v87, 0.025
      %v91 = vmul.f32 %v90, 0.05
      %v92 = vsel %vm88, %v89, %v91
      %93 = vadd.xlane.f32.xlu0 %v92
      %v94 = vpop.xlane.xlu0 %93
      %v95 = vrot.slane %v94, 4
      %v96 = vadd.f32 %v94, %v95
      %v97 = vrot.slane %v96, 2
      %v98 = vadd.f32 %v96, %v97
      %v99 = vrot.slane %v98, 1
      %v100 = vadd.f32 %v98, %v99
      %vm101 = vcmask 0
      %102 = vst.msk [vmem:[#allocation8] sm:$0x1] %vm101, %v100
      %v103 = vmul.f32 %v68, %v69
      %104 = vadd.xlane.f32.xlu0 %v103
      %v105 = vpop.xlane.xlu0 %104
      %v106 = vmul.f32 %v68, %v68
      %107 = vadd.xlane.f32.xlu0 %v106
      %v108 = vpop.xlane.xlu0 %107
      %v109 = vrsqrt.pop %v108
      %v110 = vmul.f32 %v109, %v108
      %v111 = vmul.f32 %v110, %v109
      %v112 = vmul.f32 0.5, %v111
      %v113 = vsub.f32 1.5, %v112
      %v114 = vmul.f32 %v109, %v113
      %v115 = vmul.f32 %v108, %v114
      %vm116 = vcmp.eq.f32.partialorder %v108, inf
      %v117 = vsel %vm116, %v108, %v115
      %vm118 = vcmp.eq.f32.partialorder %v108, 0.0
      %v119 = vand.u32 %v108, 2147483648
      %v120 = vsel %vm118, %v119, %v117
      %v121 = vmul.f32 %v69, %v69
      %122 = vadd.xlane.f32.xlu0 %v121
      %v123 = vpop.xlane.xlu0 %122
      %v124 = vrsqrt.pop %v123
      %v125 = vmul.f32 %v124, %v123
      %v126 = vmul.f32 %v125, %v124
      %v127 = vmul.f32 0.5, %v126
      %v128 = vsub.f32 1.5, %v127
      %v129 = vmul.f32 %v124, %v128
      %v130 = vmul.f32 %v123, %v129
      %vm131 = vcmp.eq.f32.partialorder %v123, inf
      %v132 = vsel %vm131, %v123, %v130
      %vm133 = vcmp.eq.f32.partialorder %v123, 0.0
      %v134 = vand.u32 %v123, 2147483648
      %v135 = vsel %vm133, %v134, %v132
      %v136 = vmul.f32 %v120, %v135
      %v137 = vmax.f32 %v136, 1e-08
      %v138 = vrcp.pop %v137
      %v139 = vmul.f32 %v137, %v138
      %v140 = vsub.f32 1.0, %v139
      %v141 = vmul.f32 %v138, %v140
      %v142 = vadd.f32 %v138, %v141
      %vm143 = vweird.f32 %v137
      %vm144 = vweird.f32 %v138
      %vm145 = vmor %vm143, %vm144
      %v146 = vsel %vm145, %v138, %v142
      %v147 = vand.u32 2147483647, %v137
      %vm148 = vcmp.eq.f32.partialorder %v147, 8.507059e+37
      %v149 = vand.u32 %v137, 2147483648
      %v150 = vor.u32 1.1754944e-38, %v149
      %v151 = vsel %vm148, %v150, %v146
      %v152 = vmul.f32 %v105, %v151
      %v153 = vsub.f32 1.0, %v152
      %v154 = vrot.slane %v153, 4
      %v155 = vadd.f32 %v153, %v154
      %v156 = vrot.slane %v155, 2
      %v157 = vadd.f32 %v155, %v156
      %v158 = vrot.slane %v157, 1
      %v159 = vadd.f32 %v157, %v158
      %160 = vst.msk [vmem:[#allocation9] sm:$0x1] %vm101, %v159
    $region37: #{tpu_custom_call.1} parent=1 // pred_fallthru
      _
    %v161 = vld [vmem:[#allocation2] sm:$0xf]
    %v162 = vld [vmem:[#allocation2 + $0x4] sm:$0xf]
    %v163 = vld [vmem:[#allocation15] sm:$0xff]
    %v164 = vld [vmem:[#allocation15 + $0x8] sm:$0xff]
    %v165 = vld [vmem:[#allocation15 + $0x10] sm:$0xff]
    %v166 = vld [vmem:[#allocation15 + $0x18] sm:$0xff]
    %v167 = vld [vmem:[#allocation15 + $0x20] sm:$0xff]
    %v168 = vld [vmem:[#allocation15 + $0x28] sm:$0xff]
    %v169 = vld [vmem:[#allocation15 + $0x30] sm:$0xff]
    %v170 = vld [vmem:[#allocation15 + $0x38] sm:$0xff]
    %v171 = vld [vmem:[#allocation15 + $0x40] sm:$0xff]
    %v172 = vld [vmem:[#allocation15 + $0x48] sm:$0xff]
    %v173 = vld [vmem:[#allocation15 + $0x50] sm:$0xff]
    %v174 = vld [vmem:[#allocation15 + $0x58] sm:$0xff]
    %v175 = vld [vmem:[#allocation15 + $0x60] sm:$0xff]
    %v176 = vld [vmem:[#allocation15 + $0x68] sm:$0xff]
    %v177 = vld [vmem:[#allocation15 + $0x70] sm:$0xff]
    %v178 = vld [vmem:[#allocation15 + $0x78] sm:$0xff]
    %v181 = vunpack.c.l.b16 %v161
    %v182 = vunpack.c.l.b16 %v162
    %v183 = vpack.c.b16 %v182, %v181
    %v201 = vunpack.c.l.b16 %v163
    %v202 = vunpack.c.h.b16 %v163
    %v203 = vunpack.c.l.b16 %v164
    %v204 = vunpack.c.h.b16 %v164
    %v205 = vunpack.c.l.b16 %v165
    %v206 = vunpack.c.h.b16 %v165
    %v207 = vunpack.c.l.b16 %v166
    %v208 = vunpack.c.h.b16 %v166
    %v209 = vunpack.c.l.b16 %v167
    %v210 = vunpack.c.h.b16 %v167
    %v211 = vunpack.c.l.b16 %v168
    %v212 = vunpack.c.h.b16 %v168
    %v213 = vunpack.c.l.b16 %v169
    %v214 = vunpack.c.h.b16 %v169
    %v215 = vunpack.c.l.b16 %v170
    %v216 = vunpack.c.h.b16 %v170
    %v217 = vunpack.c.l.b16 %v171
    %v218 = vunpack.c.h.b16 %v171
    %v219 = vunpack.c.l.b16 %v172
    %v220 = vunpack.c.h.b16 %v172
    %v221 = vunpack.c.l.b16 %v173
    %v222 = vunpack.c.h.b16 %v173
    %v223 = vunpack.c.l.b16 %v174
    %v224 = vunpack.c.h.b16 %v174
    %v225 = vunpack.c.l.b16 %v175
    %v226 = vunpack.c.h.b16 %v175
    %v227 = vunpack.c.l.b16 %v176
    %v228 = vunpack.c.h.b16 %v176
    %v229 = vunpack.c.l.b16 %v177
    %v230 = vunpack.c.h.b16 %v177
    %v231 = vunpack.c.l.b16 %v178
    %v232 = vunpack.c.h.b16 %v178
    %v233 = vpack.c.b16 %v203, %v201
    %v234 = vpack.c.b16 %v204, %v202
    %v235 = vpack.c.b16 %v207, %v205
    %v236 = vpack.c.b16 %v208, %v206
    %v237 = vpack.c.b16 %v211, %v209
    %v238 = vpack.c.b16 %v212, %v210
    %v239 = vpack.c.b16 %v215, %v213
    %v240 = vpack.c.b16 %v216, %v214
    %v241 = vpack.c.b16 %v219, %v217
    %v242 = vpack.c.b16 %v220, %v218
    %v243 = vpack.c.b16 %v223, %v221
    %v244 = vpack.c.b16 %v224, %v222
    %v245 = vpack.c.b16 %v227, %v225
    %v246 = vpack.c.b16 %v228, %v226
    %v247 = vpack.c.b16 %v231, %v229
    %v248 = vpack.c.b16 %v232, %v230
    %265 = vmatpush.bf16.msra.mxu0 %v247
    %266 = vmatpush.bf16.msra.mxu0 %v245
    %267 = vmatpush.bf16.msra.mxu0 %v243
    %268 = vmatpush.bf16.msra.mxu0 %v241
    %269 = vmatpush.bf16.msra.mxu0 %v239
    %270 = vmatpush.bf16.msra.mxu0 %v237
    %271 = vmatpush.bf16.msra.mxu0 %v235
    %272 = vmatpush.bf16.msra.mxu0 %v233
    %273 = vmatmul.bf16.gmra.mxu0 %v183
    %v274 = vpop.f32.mrf.mxu0
    %v275 = vadd.f32 0.0, %v274
    %v276 = vpop.f32.mrf.mxu0
    %v277 = vadd.f32 0.0, %v276
    %278 = vdwg.mxu0
    %279 = vmatpush.bf16.msra.mxu0 %v248
    %280 = vmatpush.bf16.msra.mxu0 %v246
    %281 = vmatpush.bf16.msra.mxu0 %v244
    %282 = vmatpush.bf16.msra.mxu0 %v242
    %283 = vmatpush.bf16.msra.mxu0 %v240
    %284 = vmatpush.bf16.msra.mxu0 %v238
    %285 = vmatpush.bf16.msra.mxu0 %v236
    %286 = vmatpush.bf16.msra.mxu0 %v234
    %287 = vmatmul.bf16.gmra.mxu0 %v183
    %v288 = vpop.f32.mrf.mxu0
    %v289 = vadd.f32 0.0, %v288
    %v290 = vpop.f32.mrf.mxu0
    %v291 = vadd.f32 0.0, %v290
    %292 = vdwg.mxu0
    %v293 = vmul.f32 %v275, %v275
    %v294 = vmul.f32 %v277, %v277
    %v295 = vmul.f32 %v289, %v289
    %v296 = vmul.f32 %v291, %v291
    %v297 = vadd.f32 %v293, %v295
    %v298 = vadd.f32 %v294, %v296
    %v299 = vmul.f32 %v297, 0.0027777778
    %v300 = vmul.f32 %v298, 0.0027777778
    %v301 = vld [vmem:[#allocation3] sm:$0xff]
    %302 = vadd.xlane.f32.xlu0 %v299
    %v303 = vpop.xlane.xlu0 %302
    %v304 = vadd.f32 %v301, %v303
    %vm305 = vcmask 7168
    %306 = vst.msk [vmem:[#allocation3] sm:$0xff] %vm305, %v304
    %v307 = vld [vmem:[#allocation4] sm:$0xff]
    %308 = vadd.xlane.f32.xlu0 %v300
    %v309 = vpop.xlane.xlu0 %308
    %v310 = vadd.f32 %v307, %v309
    %311 = vst.msk [vmem:[#allocation4] sm:$0xff] %vm305, %v310
    %v312 = vld [vmem:[#allocation5] sm:$0xff]
    %v313 = vmul.f32 %v299, %v299
    %314 = vadd.xlane.f32.xlu0 %v313
    %v315 = vpop.xlane.xlu0 %314
    %v316 = vadd.f32 %v312, %v315
    %317 = vst.msk [vmem:[#allocation5] sm:$0xff] %vm305, %v316
    %v318 = vld [vmem:[#allocation6] sm:$0xff]
    %v319 = vmul.f32 %v300, %v300
    %320 = vadd.xlane.f32.xlu0 %v319
    %v321 = vpop.xlane.xlu0 %320
    %v322 = vadd.f32 %v318, %v321
    %323 = vst.msk [vmem:[#allocation6] sm:$0xff] %vm305, %v322
    %v324 = vld [vmem:[#allocation7] sm:$0xff]
    %v325 = vmul.f32 %v299, %v300
    %326 = vadd.xlane.f32.xlu0 %v325
    %v327 = vpop.xlane.xlu0 %326
    %v328 = vadd.f32 %v324, %v327
    %329 = vst.msk [vmem:[#allocation7] sm:$0xff] %vm305, %v328
    // Predicated region
    $region38: #{tpu_custom_call.1} parent=1 // pred_check
      %p330 = pneg %p64
    $region39: #{tpu_custom_call.1} parent=1 // pred_check_branch
      %332 = sbr.rel (%p330) target = $region41
    $region40: #{tpu_custom_call.1} parent=1 // pred_region
      %v333 = vld [vmem:[%s4] sm:$0x3]
      %v334 = vld [vmem:[#allocation3] sm:$0xff]
      %vm335 = vcmask 64512
      %v337 = vsel %vm335, %v333, 0
      %339 = vmatpush.msra.mxu0 0.0
      %340 = vmatpush.msra.mxu0 0.0
      %341 = vmatpush.msra.mxu0 0.0
      %342 = vmatpush.msra.mxu0 0.0
      %343 = vmatpush.msra.mxu0 0.0
      %344 = vmatpush.msra.mxu0 0.0
      %345 = vmatpush.msra.mxu0 0.0
      %346 = vmatpush.msra.mxu0 0.0
      %347 = vmatpush.msra.mxu0 0.0
      %348 = vmatpush.msra.mxu0 0.0
      %349 = vmatpush.msra.mxu0 0.0
      %350 = vmatpush.msra.mxu0 0.0
      %351 = vmatpush.msra.mxu0 0.0
      %352 = vmatpush.msra.mxu0 0.0
      %353 = vmatpush.msra.mxu0 0.0
      %354 = vmatpush.msra.mxu0 %v334
      %355 = vmatmul.f32.gmra.mxu0 %v337
      %v356 = vpop.f32.mrf.mxu0
      %v357 = vadd.f32 0.0, %v356
      %358 = vdwg.mxu0
      %v359 = vld [vmem:[#allocation4] sm:$0xff]
      %360 = vmatpush.msra.mxu0 0.0
      %361 = vmatpush.msra.mxu0 0.0
      %362 = vmatpush.msra.mxu0 0.0
      %363 = vmatpush.msra.mxu0 0.0
      %364 = vmatpush.msra.mxu0 0.0
      %365 = vmatpush.msra.mxu0 0.0
      %366 = vmatpush.msra.mxu0 0.0
      %367 = vmatpush.msra.mxu0 0.0
      %368 = vmatpush.msra.mxu0 0.0
      %369 = vmatpush.msra.mxu0 0.0
      %370 = vmatpush.msra.mxu0 0.0
      %371 = vmatpush.msra.mxu0 0.0
      %372 = vmatpush.msra.mxu0 0.0
      %373 = vmatpush.msra.mxu0 0.0
      %374 = vmatpush.msra.mxu0 0.0
      %375 = vmatpush.msra.mxu0 %v359
      %376 = vmatmul.f32.gmra.mxu0 %v337
      %v377 = vpop.f32.mrf.mxu0
      %v378 = vadd.f32 0.0, %v377
      %379 = vdwg.mxu0
      %v380 = vld [vmem:[#allocation5] sm:$0xff]
      %381 = vmatpush.msra.mxu0 0.0
      %382 = vmatpush.msra.mxu0 0.0
      %383 = vmatpush.msra.mxu0 0.0
      %384 = vmatpush.msra.mxu0 0.0
      %385 = vmatpush.msra.mxu0 0.0
      %386 = vmatpush.msra.mxu0 0.0
      %387 = vmatpush.msra.mxu0 0.0
      %388 = vmatpush.msra.mxu0 0.0
      %389 = vmatpush.msra.mxu0 0.0
      %390 = vmatpush.msra.mxu0 0.0
      %391 = vmatpush.msra.mxu0 0.0
      %392 = vmatpush.msra.mxu0 0.0
      %393 = vmatpush.msra.mxu0 0.0
      %394 = vmatpush.msra.mxu0 0.0
      %395 = vmatpush.msra.mxu0 0.0
      %396 = vmatpush.msra.mxu0 %v380
      %397 = vmatmul.f32.gmra.mxu0 %v337
      %v398 = vpop.f32.mrf.mxu0
      %v399 = vadd.f32 0.0, %v398
      %400 = vdwg.mxu0
      %v401 = vld [vmem:[#allocation6] sm:$0xff]
      %402 = vmatpush.msra.mxu0 0.0
      %403 = vmatpush.msra.mxu0 0.0
      %404 = vmatpush.msra.mxu0 0.0
      %405 = vmatpush.msra.mxu0 0.0
      %406 = vmatpush.msra.mxu0 0.0
      %407 = vmatpush.msra.mxu0 0.0
      %408 = vmatpush.msra.mxu0 0.0
      %409 = vmatpush.msra.mxu0 0.0
      %410 = vmatpush.msra.mxu0 0.0
      %411 = vmatpush.msra.mxu0 0.0
      %412 = vmatpush.msra.mxu0 0.0
      %413 = vmatpush.msra.mxu0 0.0
      %414 = vmatpush.msra.mxu0 0.0
      %415 = vmatpush.msra.mxu0 0.0
      %416 = vmatpush.msra.mxu0 0.0
      %417 = vmatpush.msra.mxu0 %v401
      %418 = vmatmul.f32.gmra.mxu0 %v337
      %v419 = vpop.f32.mrf.mxu0
      %v420 = vadd.f32 0.0, %v419
      %421 = vdwg.mxu0
      %v422 = vld [vmem:[#allocation7] sm:$0xff]
      %423 = vmatpush.msra.mxu0 0.0
      %424 = vmatpush.msra.mxu0 0.0
      %425 = vmatpush.msra.mxu0 0.0
      %426 = vmatpush.msra.mxu0 0.0
      %427 = vmatpush.msra.mxu0 0.0
      %428 = vmatpush.msra.mxu0 0.0
      %429 = vmatpush.msra.mxu0 0.0
      %430 = vmatpush.msra.mxu0 0.0
      %431 = vmatpush.msra.mxu0 0.0
      %432 = vmatpush.msra.mxu0 0.0
      %433 = vmatpush.msra.mxu0 0.0
      %434 = vmatpush.msra.mxu0 0.0
      %435 = vmatpush.msra.mxu0 0.0
      %436 = vmatpush.msra.mxu0 0.0
      %437 = vmatpush.msra.mxu0 0.0
      %438 = vmatpush.msra.mxu0 %v422
      %439 = vmatmul.f32.gmra.mxu0 %v337
      %v440 = vpop.f32.mrf.mxu0
      %v441 = vadd.f32 0.0, %v440
      %442 = vdwg.mxu0
      %v443 = vmul.f32 %v357, %v357
      %v444 = vsub.f32 %v399, %v443
      %v445 = vmax.f32 %v444, 0.0
      %v446 = vmul.f32 %v445, 1.003861
      %v447 = vmul.f32 %v378, %v378
      %v448 = vsub.f32 %v420, %v447
      %v449 = vmax.f32 %v448, 0.0
      %v450 = vmul.f32 %v449, 1.003861
      %v451 = vmul.f32 %v357, %v378
      %v452 = vsub.f32 %v441, %v451
      %v453 = vrsqrt.pop %v446
      %v454 = vmul.f32 %v453, %v446
      %v455 = vmul.f32 %v454, %v453
      %v456 = vmul.f32 0.5, %v455
      %v457 = vsub.f32 1.5, %v456
      %v458 = vmul.f32 %v453, %v457
      %v459 = vmul.f32 %v446, %v458
      %vm460 = vcmp.eq.f32.partialorder %v446, inf
      %v461 = vsel %vm460, %v446, %v459
      %vm462 = vcmp.eq.f32.partialorder %v446, 0.0
      %v463 = vand.u32 %v446, 2147483648
      %v464 = vsel %vm462, %v463, %v461
      %v465 = vrsqrt.pop %v450
      %v466 = vmul.f32 %v465, %v450
      %v467 = vmul.f32 %v466, %v465
      %v468 = vmul.f32 0.5, %v467
      %v469 = vsub.f32 1.5, %v468
      %v470 = vmul.f32 %v465, %v469
      %v471 = vmul.f32 %v450, %v470
      %vm472 = vcmp.eq.f32.partialorder %v450, inf
      %v473 = vsel %vm472, %v450, %v471
      %vm474 = vcmp.eq.f32.partialorder %v450, 0.0
      %v475 = vand.u32 %v450, 2147483648
      %v476 = vsel %vm474, %v475, %v473
      %v477 = vmul.f32 %v464, %v476
      %v478 = vadd.f32 %v477, 1e-08
      %v479 = vrcp.pop %v478
      %v480 = vmul.f32 %v478, %v479
      %v481 = vsub.f32 1.0, %v480
      %v482 = vmul.f32 %v479, %v481
      %v483 = vadd.f32 %v479, %v482
      %vm484 = vweird.f32 %v478
      %vm485 = vweird.f32 %v479
      %vm486 = vmor %vm484, %vm485
      %v487 = vsel %vm486, %v479, %v483
      %v488 = vand.u32 2147483647, %v478
      %vm489 = vcmp.eq.f32.partialorder %v488, 8.507059e+37
      %v490 = vand.u32 %v478, 2147483648
      %v491 = vor.u32 1.1754944e-38, %v490
      %v492 = vsel %vm489, %v491, %v487
      %v493 = vmul.f32 %v452, %v492
      %vm494 = vcmask 1024
      %v495 = vsel %vm494, %v493, 0.0
      %v496 = vrot.slane %v495, 4
      %v497 = vadd.f32 %v495, %v496
      %v498 = vrot.slane %v497, 2
      %v499 = vadd.f32 %v497, %v498
      %v500 = vrot.slane %v499, 1
      %v501 = vadd.f32 %v499, %v500
      %v502 = vmul.f32 %v501, 0.5
      %v503 = vand.u32 2147483647, %v502
      %v504 = vsub.f32 1.0, %v503
      %v505 = vmul.f32 %v504, 1.442695
      %v506 = vpow.pop %v505
      %v507 = vld [vmem:[#allocation8] sm:$0x1]
      %v508 = vmul.f32 %v506, %v507
      %v509 = vmul.f32 %v508, 0.0009765625
      %v510 = vld [vmem:[#allocation9] sm:$0x1]
      %v511 = vmul.f32 %v510, 0.125
      %v512 = vadd.f32 %v509, %v511
      %vm513 = vcmask 0
      %514 = vst.msk [vmem:[#allocation16] sm:$0x1] %vm513, %v512
    $region41: #{tpu_custom_call.1} parent=1 // pred_fallthru
      _
    // Predicated region
    $region42: #{tpu_custom_call.1} parent=1 // pred_check
      _
    $region43: #{tpu_custom_call.1} parent=1 // pred_check_branch
      %516 = sbr.rel (0) target = $region45
    $region44: #{tpu_custom_call.1} parent=1 // pred_region
      %518 = vsyncadd [#allocation12], 0
      %s520 = sshll.u32 [#allocation16], 4
      %s521 = int_to_ptr.vmem [resolvable:$true] %s520
      %s522 = sshll.u32 %s5, 4
      %s523 = int_to_ptr.hbm [resolvable:$true] %s522
      %525 = dma.vmem_to_hbm [thread:$0]  %s521, 16, %s523, [#allocation12]
    $region45: #{tpu_custom_call.1} parent=1 // pred_fallthru
      _
    // Predicated region
    $region46: #{tpu_custom_call.1} parent=1 // pred_check
      _
    $region47: #{tpu_custom_call.1} parent=1 // pred_check_branch
      %527 = sbr.rel (0) target = $region49
    $region48: #{tpu_custom_call.1} parent=1 // pred_region
      %529 = dma.done [#allocation12], 16
    $region49: #{tpu_custom_call.1} parent=1 // pred_fallthru
      _
    %530 = vsyncpa [#allocation11], 1
    %531 = vsyncpa [#allocation14], 1
    %532 = vsyncpa [#allocation12], 1

</llo_original>
